<compile_context>
chip_gen: v7x
topology: tpu7x:2x2x1
jax: 0.10.0
libtpu: 0.0.40
codegen_flags: <defaults>
</compile_context>

<pallas_src>
import jax
import jax.numpy as jnp
from jax.experimental import pallas as pl
from jax.experimental.pallas import tpu as pltpu


# ----------------------------------------------------------------------------
# Fused BAM channel-attention kernel (NCHW layout, spatial on lanes).
#   x_ref : (NB, C, H*W)   activations, H*W on the lane axis
#   w1/b1 : (C, Cr), (1, Cr)
#   w2/b2 : (Cr, C), (1, C)
#   o_ref : (NB, C, H*W)
# ----------------------------------------------------------------------------
def _bam_kernel(x_ref, w1_ref, b1_ref, w2_ref, b2_ref, o_ref):
    inv_hw = 1.0 / x_ref.shape[2]

    # Squeeze: AdaptiveAvgPool2d(1) == per-(sample, channel) mean over H*W.
    # Lane reduction, accumulated in f32.  (First streaming read of x.)
    g = jnp.sum(x_ref[...], axis=2, dtype=jnp.float32) * inv_hw          # (NB, C)

    # Excite: Linear -> ReLU -> Linear -> Sigmoid, batched over the block's
    # samples.  Tiny matmuls; MXU is nowhere near the bottleneck.
    h = jnp.dot(g, w1_ref[...], preferred_element_type=jnp.float32) + b1_ref[...]
    h = jnp.maximum(h, 0.0)                                              # (NB, Cr)
    a = jnp.dot(h, w2_ref[...], preferred_element_type=jnp.float32) + b2_ref[...]
    a = jax.nn.sigmoid(a)                                                # (NB, C)

    # Gate: x * y.expand_as(x).  Second, independent streaming read of x so the
    # whole tile is never held live across the FC math; the per-(n, c) gate is
    # broadcast across the H*W lanes.
    gate = a.astype(o_ref.dtype)[:, :, None]                             # (NB, C, 1)
    o_ref[...] = x_ref[...] * gate


# ----------------------------------------------------------------------------
# Per-generation VMEM budget: ~75% of physical VMEM.
#   v5e / v6e : 128 MiB physical  -> ~96 MiB budget
#   v7x       :  64 MiB physical  -> ~48 MiB budget
# ----------------------------------------------------------------------------
def _vmem_budget_bytes():
    try:
        cap = int(pltpu.get_tpu_info().vmem_capacity_bytes)
    except Exception:
        cap = 64 * 1024 * 1024  # conservative fallback (v7x physical size)
    return max(32 * 1024 * 1024, min(cap * 3 // 4, 96 * 1024 * 1024))


# ----------------------------------------------------------------------------
# Wrapper: NCHW in / NCHW out (matches BAMBlock.forward).  No transposes —
# the (N, C, H, W) <-> (N, C, H*W) reshapes are free (contiguous views).
# ----------------------------------------------------------------------------
def bam_block(x_nchw, w1, b1, w2, b2, *, block_n=None):
    N, C, H, W = x_nchw.shape
    HW = H * W
    Cr = w1.shape[-1]
    dtype = x_nchw.dtype
    itemsize = jnp.dtype(dtype).itemsize

    x = x_nchw.reshape(N, C, HW)
    b1 = b1.reshape(1, Cr)
    b2 = b2.reshape(1, C)

    vmem_budget = _vmem_budget_bytes()

    if block_n is None:
        # Size the x tile from the VMEM budget: 2 input + 2 output double
        # buffers of the x stream plus weights/headroom must fit, targeting
        # a ~2-8 MiB tile (where streaming kernels reach ~85%+ of roofline).
        target_tile_bytes = min(8 * 1024 * 1024,
                                max(2 * 1024 * 1024, vmem_budget // 6))
        per_sample_bytes = C * HW * itemsize
        block_n = max(1, target_tile_bytes // per_sample_bytes)
        if N > 1:
            # Guarantee >= 2 grid steps so the "parallel" batch axis can be
            # sharded across v7x's two TensorCores.
            block_n = min(block_n, (N + 1) // 2)
        block_n = min(block_n, N)
    block_n = int(block_n)
    # Note: a single sample larger than the tile budget (huge C*H*W) would need
    # an additional spatial grid axis with a two-pass pool; not needed here.

    grid = (pl.cdiv(N, block_n),)

    out = pl.pallas_call(
        _bam_kernel,
        out_shape=jax.ShapeDtypeStruct((N, C, HW), dtype),
        grid=grid,
        in_specs=[
            pl.BlockSpec((block_n, C, HW), lambda i: (i, 0, 0)),
            pl.BlockSpec((C, Cr), lambda i: (0, 0)),
            pl.BlockSpec((1, Cr), lambda i: (0, 0)),
            pl.BlockSpec((Cr, C), lambda i: (0, 0)),
            pl.BlockSpec((1, C), lambda i: (0, 0)),
        ],
        out_specs=pl.BlockSpec((block_n, C, HW), lambda i: (i, 0, 0)),
        compiler_params=pltpu.CompilerParams(
            dimension_semantics=("parallel",),
            vmem_limit_bytes=vmem_budget,
        ),
    )(x, w1, b1, w2, b2)

    return out.reshape(N, C, H, W)


# ----------------------------------------------------------------------------
# Pure-JAX reference (for correctness check).
# ----------------------------------------------------------------------------
def bam_reference(x, w1, b1, w2, b2):
    g = jnp.mean(x, axis=(2, 3))                      # (N, C)
    h = jnp.maximum(g @ w1 + b1, 0.0)
    a = jax.nn.sigmoid(h @ w2 + b2)                   # (N, C)
    return x * a[:, :, None, None]


if __name__ == "__main__":
    N, C, H, W = 4, 128, 16, 16
    reduction = 16
    Cr = C // reduction

    keys = jax.random.split(jax.random.PRNGKey(0), 5)
    x = jax.random.normal(keys[0], (N, C, H, W), jnp.float32)
    s1 = 1.0 / (C ** 0.5)
    w1 = s1 * jax.random.normal(keys[1], (C, Cr), jnp.float32)
    b1 = s1 * jax.random.normal(keys[2], (1, Cr), jnp.float32)
    s2 = 1.0 / (Cr ** 0.5)
    w2 = s2 * jax.random.normal(keys[3], (Cr, C), jnp.float32)
    b2 = s2 * jax.random.normal(keys[4], (1, C), jnp.float32)

    out = bam_block(x, w1, b1, w2, b2)
    out = jax.block_until_ready(out)

    ref = bam_reference(x, w1, b1, w2, b2)
    assert out.shape == x.shape
    assert jnp.all(jnp.isfinite(out))
    assert jnp.allclose(out, ref, atol=1e-5, rtol=1e-5)
    print("KERNEL_OK")
</pallas_src>

<mosaic_0001>
module attributes {stable_mosaic.version = 11 : i64} {
  func.func @_bam_kernel(%arg0: i32, %arg1: memref<2x128x256xf32, #tpu.memory_space<vmem>>, %arg2: memref<128x8xf32, #tpu.memory_space<vmem>>, %arg3: memref<1x8xf32, #tpu.memory_space<vmem>>, %arg4: memref<8x128xf32, #tpu.memory_space<vmem>>, %arg5: memref<1x128xf32, #tpu.memory_space<vmem>>, %arg6: memref<2x128x256xf32, #tpu.memory_space<vmem>>) attributes {dimension_semantics = [#tpu.dimension_semantics<parallel>], iteration_bounds = array<i64: 2>, scalar_prefetch = 0 : i64, scratch_operands = 0 : i64, tpu.core_type = #tpu.core_type<tc>, window_params = [{transform_indices = @transform_0, window_bounds = array<i64: 2, 128, 256>}, {pipeline_mode = #tpu.pipeline_mode<synchronous>, transform_indices = @transform_1, window_bounds = array<i64: 128, 8>}, {pipeline_mode = #tpu.pipeline_mode<synchronous>, transform_indices = @transform_2, window_bounds = array<i64: 1, 8>}, {pipeline_mode = #tpu.pipeline_mode<synchronous>, transform_indices = @transform_3, window_bounds = array<i64: 8, 128>}, {pipeline_mode = #tpu.pipeline_mode<synchronous>, transform_indices = @transform_4, window_bounds = array<i64: 1, 128>}, {transform_indices = @transform_5, window_bounds = array<i64: 2, 128, 256>}]} {
    %c0 = arith.constant 0 : index
    %c0_0 = arith.constant 0 : index
    %c0_1 = arith.constant 0 : index
    %0 = vector.load %arg1[%c0, %c0_0, %c0_1] : memref<2x128x256xf32, #tpu.memory_space<vmem>>, vector<2x128x256xf32>
    %cst = arith.constant dense<0.000000e+00> : vector<2x128xf32>
    %1 = vector.multi_reduction <add>, %0, %cst [2] : vector<2x128x256xf32> to vector<2x128xf32>
    %cst_2 = arith.constant 3.906250e-03 : f32
    %2 = vector.broadcast %cst_2 : f32 to vector<2x128xf32>
    %3 = arith.mulf %1, %2 : vector<2x128xf32>
    %c0_3 = arith.constant 0 : index
    %c0_4 = arith.constant 0 : index
    %4 = vector.load %arg2[%c0_3, %c0_4] : memref<128x8xf32, #tpu.memory_space<vmem>>, vector<128x8xf32>
    %cst_5 = arith.constant dense<0.000000e+00> : vector<2x8xf32>
    %5 = tpu.matmul %3, %4, %cst_5 {dimension_numbers = #tpu.dot_dimension_numbers<[1], [0], [0], [1], [0, 0, 1, 1], [], []>} : vector<2x128xf32>, vector<128x8xf32>, vector<2x8xf32> -> vector<2x8xf32>
    %c0_6 = arith.constant 0 : index
    %c0_7 = arith.constant 0 : index
    %6 = vector.load %arg3[%c0_6, %c0_7] : memref<1x8xf32, #tpu.memory_space<vmem>>, vector<1x8xf32>
    %7 = vector.broadcast %6 : vector<1x8xf32> to vector<2x8xf32>
    %8 = arith.addf %5, %7 : vector<2x8xf32>
    %cst_8 = arith.constant 0.000000e+00 : f32
    %9 = vector.broadcast %cst_8 : f32 to vector<2x8xf32>
    %10 = arith.maximumf %8, %9 : vector<2x8xf32>
    %c0_9 = arith.constant 0 : index
    %c0_10 = arith.constant 0 : index
    %11 = vector.load %arg4[%c0_9, %c0_10] : memref<8x128xf32, #tpu.memory_space<vmem>>, vector<8x128xf32>
    %cst_11 = arith.constant dense<0.000000e+00> : vector<2x128xf32>
    %12 = tpu.matmul %10, %11, %cst_11 {dimension_numbers = #tpu.dot_dimension_numbers<[1], [0], [0], [1], [0, 0, 1, 1], [], []>} : vector<2x8xf32>, vector<8x128xf32>, vector<2x128xf32> -> vector<2x128xf32>
    %c0_12 = arith.constant 0 : index
    %c0_13 = arith.constant 0 : index
    %13 = vector.load %arg5[%c0_12, %c0_13] : memref<1x128xf32, #tpu.memory_space<vmem>>, vector<1x128xf32>
    %14 = vector.broadcast %13 : vector<1x128xf32> to vector<2x128xf32>
    %15 = arith.addf %12, %14 : vector<2x128xf32>
    %16 = arith.negf %15 : vector<2x128xf32>
    %17 = math.exp %16 : vector<2x128xf32>
    %cst_14 = arith.constant 1.000000e+00 : f32
    %18 = vector.broadcast %cst_14 : f32 to vector<2x128xf32>
    %19 = arith.addf %18, %17 : vector<2x128xf32>
    %20 = arith.divf %18, %19 : vector<2x128xf32>
    %21 = vector.shape_cast %20 : vector<2x128xf32> to vector<2x128x1xf32>
    %c0_15 = arith.constant 0 : index
    %c0_16 = arith.constant 0 : index
    %c0_17 = arith.constant 0 : index
    %22 = vector.load %arg1[%c0_15, %c0_16, %c0_17] : memref<2x128x256xf32, #tpu.memory_space<vmem>>, vector<2x128x256xf32>
    %23 = vector.broadcast %21 : vector<2x128x1xf32> to vector<2x128x256xf32>
    %24 = arith.mulf %22, %23 : vector<2x128x256xf32>
    %c0_18 = arith.constant 0 : index
    %c0_19 = arith.constant 0 : index
    %c0_20 = arith.constant 0 : index
    %25 = vector.load %arg6[%c0_18, %c0_19, %c0_20] : memref<2x128x256xf32, #tpu.memory_space<vmem>>, vector<2x128x256xf32>
    tpu.vector_store %arg6[%c0_18, %c0_19, %c0_20], %24 {strides = array<i32>} : memref<2x128x256xf32, #tpu.memory_space<vmem>>, vector<2x128x256xf32>,
    return
  }
  func.func @transform_0(%arg0: i32) -> (i32, i32, i32) {
    %c0_i32 = arith.constant 0 : i32
    %c0_i32_0 = arith.constant 0 : i32
    %c0_i32_1 = arith.constant 0 : i32
    return %arg0, %c0_i32, %c0_i32_0 : i32, i32, i32
  }
  func.func @transform_1(%arg0: i32) -> (i32, i32) {
    %c0_i32 = arith.constant 0 : i32
    %c0_i32_0 = arith.constant 0 : i32
    %c0_i32_1 = arith.constant 0 : i32
    return %c0_i32, %c0_i32_0 : i32, i32
  }
  func.func @transform_2(%arg0: i32) -> (i32, i32) {
    %c0_i32 = arith.constant 0 : i32
    %c0_i32_0 = arith.constant 0 : i32
    %c0_i32_1 = arith.constant 0 : i32
    return %c0_i32, %c0_i32_0 : i32, i32
  }
  func.func @transform_3(%arg0: i32) -> (i32, i32) {
    %c0_i32 = arith.constant 0 : i32
    %c0_i32_0 = arith.constant 0 : i32
    %c0_i32_1 = arith.constant 0 : i32
    return %c0_i32, %c0_i32_0 : i32, i32
  }
  func.func @transform_4(%arg0: i32) -> (i32, i32) {
    %c0_i32 = arith.constant 0 : i32
    %c0_i32_0 = arith.constant 0 : i32
    %c0_i32_1 = arith.constant 0 : i32
    return %c0_i32, %c0_i32_0 : i32, i32
  }
  func.func @transform_5(%arg0: i32) -> (i32, i32, i32) {
    %c0_i32 = arith.constant 0 : i32
    %c0_i32_0 = arith.constant 0 : i32
    %c0_i32_1 = arith.constant 0 : i32
    return %arg0, %c0_i32, %c0_i32_0 : i32, i32, i32
  }
}

</mosaic_0001>

<llo_original>
// kernel: tpu_custom_call.1
$region0: #{tpu_custom_call.1}
  #allocation0 [shape = 'u32[]', space=smem, size = 0x4, offset = 0x4, fixed_abs, tag = 'smem constant byte address 0x4 - core index']
  #allocation1 [shape = 'u32[144,128]{1,0:T(1,128)}', space=vmem, size = 0x12000, scoped, tag = 'internal scratch']
  %s0 = inlined_call_operand.hbm [shape: f32[4,128,256], index: 0, kind: input, shape index: {}]
  %s1 = inlined_call_operand.vmem [shape: f32[128,8], index: 1, kind: input, shape index: {}]
  %s2 = inlined_call_operand.vmem [shape: f32[1,8], index: 2, kind: input, shape index: {}]
  %s3 = inlined_call_operand.vmem [shape: f32[8,128], index: 3, kind: input, shape index: {}]
  %s4 = inlined_call_operand.vmem [shape: f32[1,128], index: 4, kind: input, shape index: {}]
  %s5 = inlined_call_operand.hbm [shape: f32[4,128,256], index: 5, kind: output, shape index: {}]
  %s6 = sld [smem:[#allocation0]]
  $region57: #{tpu_custom_call.1} parent=0
    _
  %s8 = ssub.s32 1, %s6
  %s9 = scalar_select 0, %s8, %s6
  $region1: #{tpu_custom_call.1} parent=0
    #allocation2 [shape = 'u8[524288]{0}', space=vmem, size = 0x80000, scoped, tag = 'input window, operand 0']
    #allocation3 [shape = 's32[2]{0}', space=sflag, size = 0x8, scoped, tag = 'scoped memory for tpu_custom_call.1']
    #allocation4 [shape = 's32[2]{0}', space=sflag, size = 0x8, scoped, tag = 'scoped memory for tpu_custom_call.1']
    #allocation5 [shape = 'u8[524288]{0}', space=vmem, size = 0x80000, scoped, tag = 'output window, operand 0']
    %10 = vsyncpa [#allocation3], 0
    %s11 = scalar_lea.sflag [#allocation3], 1
    %12 = vsyncpa %s11, 0
    %13 = vsyncpa [#allocation4], 0
    %s14 = scalar_lea.sflag [#allocation4], 1
    %15 = vsyncpa %s14, 0
    loop: start=0, step=1, limit=4
    $region2: #{tpu_custom_call.1} parent=1 // loop_pre_header
      _
    $region3: #{tpu_custom_call.1} parent=1 // loop_header
      %s17 = sphi 0, %s21
      %p18 = scmp.ge.s32.totalorder %s17, 4
      %s27 = sphi 0, %s29
      %s30 = sphi 0, %s27
      %s31 = sphi 0, %s30
      %s47 = sphi 0, %s31
      %s51 = sphi 0, %s51
      %s53 = sphi 0, %s51
      %s54 = sphi 0, %s53
      %s68 = sphi 0, %s54
      %s72 = sphi 0, %s72
      %s74 = sphi 0, %s72
      %s75 = sphi 0, %s74
      %s89 = sphi 0, %s75
      %s93 = sphi 0, %s93
      %s95 = sphi 0, %s93
      %s96 = sphi 0, %s95
      %s110 = sphi 0, %s96
      %s114 = sphi 0, %s114
      %s116 = sphi 0, %s114
      %s117 = sphi 0, %s116
      %s131 = sphi 0, %s117
      %s137 = sphi 0, %s139
      %s140 = sphi 0, %s137
      %s141 = sphi 0, %s140
      %s157 = sphi 0, %s141
    $region4: #{tpu_custom_call.1} parent=1 // loop_header_branch
      %20 = sbr.rel (%p18) target = $region8
    $region5: #{tpu_custom_call.1} parent=1 // loop_body
      %s22 = ssub.s32 %s17, 1
      %s23 = ssub.s32 %s17, 2
      %s24 = sadd.s32 %s17, 1
      %s25 = ssub.s32 %s17, %s24
      %p26 = scmp.eq.s32.totalorder %s25, 0
      %s28 = sadd.s32 %s27, 1
      %s29 = scalar_select %p26, %s27, %s28
      %p32 = pneg %p26
      %p33 = scmp.eq.s32.totalorder %s17, 1
      %p34 = por %p32, %p33
      %p35 = scmp.ne.s32.totalorder %s27, %s30
      %p36 = scmp.eq.s32.totalorder %s17, 0
      %p37 = por %p35, %p36
      %p38 = scmp.ne.s32.totalorder %s27, %s30
      %p39 = scmp.eq.s32.totalorder %s22, 1
      %p40 = por %p38, %p39
      %p41 = scmp.ne.s32.totalorder %s30, %s31
      %p42 = scmp.eq.s32.totalorder %s22, 0
      %p43 = por %p41, %p42
      %p44 = scmp.ne.s32.totalorder %s30, %s31
      %p45 = scmp.eq.s32.totalorder %s23, 1
      %p46 = por %p44, %p45
      %p48 = scmp.ne.s32.totalorder %s31, %s47
      %p49 = scmp.eq.s32.totalorder %s23, 0
      %p50 = por %p48, %p49
      %s52 = sadd.s32 %s51, 1
      %p55 = scmp.eq.s32.totalorder %s17, 1
      %p56 = scmp.ne.s32.totalorder %s51, %s53
      %p57 = scmp.eq.s32.totalorder %s17, 0
      %p58 = por %p56, %p57
      %p59 = scmp.ne.s32.totalorder %s51, %s53
      %p60 = scmp.eq.s32.totalorder %s22, 1
      %p61 = por %p59, %p60
      %p62 = scmp.ne.s32.totalorder %s53, %s54
      %p63 = scmp.eq.s32.totalorder %s22, 0
      %p64 = por %p62, %p63
      %p65 = scmp.ne.s32.totalorder %s53, %s54
      %p66 = scmp.eq.s32.totalorder %s23, 1
      %p67 = por %p65, %p66
      %p69 = scmp.ne.s32.totalorder %s54, %s68
      %p70 = scmp.eq.s32.totalorder %s23, 0
      %p71 = por %p69, %p70
      %s73 = sadd.s32 %s72, 1
      %p76 = scmp.eq.s32.totalorder %s17, 1
      %p77 = scmp.ne.s32.totalorder %s72, %s74
      %p78 = scmp.eq.s32.totalorder %s17, 0
      %p79 = por %p77, %p78
      %p80 = scmp.ne.s32.totalorder %s72, %s74
      %p81 = scmp.eq.s32.totalorder %s22, 1
      %p82 = por %p80, %p81
      %p83 = scmp.ne.s32.totalorder %s74, %s75
      %p84 = scmp.eq.s32.totalorder %s22, 0
      %p85 = por %p83, %p84
      %p86 = scmp.ne.s32.totalorder %s74, %s75
      %p87 = scmp.eq.s32.totalorder %s23, 1
      %p88 = por %p86, %p87
      %p90 = scmp.ne.s32.totalorder %s75, %s89
      %p91 = scmp.eq.s32.totalorder %s23, 0
      %p92 = por %p90, %p91
      %s94 = sadd.s32 %s93, 1
      %p97 = scmp.eq.s32.totalorder %s17, 1
      %p98 = scmp.ne.s32.totalorder %s93, %s95
      %p99 = scmp.eq.s32.totalorder %s17, 0
      %p100 = por %p98, %p99
      %p101 = scmp.ne.s32.totalorder %s93, %s95
      %p102 = scmp.eq.s32.totalorder %s22, 1
      %p103 = por %p101, %p102
      %p104 = scmp.ne.s32.totalorder %s95, %s96
      %p105 = scmp.eq.s32.totalorder %s22, 0
      %p106 = por %p104, %p105
      %p107 = scmp.ne.s32.totalorder %s95, %s96
      %p108 = scmp.eq.s32.totalorder %s23, 1
      %p109 = por %p107, %p108
      %p111 = scmp.ne.s32.totalorder %s96, %s110
      %p112 = scmp.eq.s32.totalorder %s23, 0
      %p113 = por %p111, %p112
      %s115 = sadd.s32 %s114, 1
      %p118 = scmp.eq.s32.totalorder %s17, 1
      %p119 = scmp.ne.s32.totalorder %s114, %s116
      %p120 = scmp.eq.s32.totalorder %s17, 0
      %p121 = por %p119, %p120
      %p122 = scmp.ne.s32.totalorder %s114, %s116
      %p123 = scmp.eq.s32.totalorder %s22, 1
      %p124 = por %p122, %p123
      %p125 = scmp.ne.s32.totalorder %s116, %s117
      %p126 = scmp.eq.s32.totalorder %s22, 0
      %p127 = por %p125, %p126
      %p128 = scmp.ne.s32.totalorder %s116, %s117
      %p129 = scmp.eq.s32.totalorder %s23, 1
      %p130 = por %p128, %p129
      %p132 = scmp.ne.s32.totalorder %s117, %s131
      %p133 = scmp.eq.s32.totalorder %s23, 0
      %p134 = por %p132, %p133
      %s135 = ssub.s32 %s17, %s24
      %p136 = scmp.eq.s32.totalorder %s135, 0
      %s138 = sadd.s32 %s137, 1
      %s139 = scalar_select %p136, %s137, %s138
      %p142 = pneg %p136
      %p143 = scmp.eq.s32.totalorder %s17, 1
      %p144 = por %p142, %p143
      %p145 = scmp.ne.s32.totalorder %s137, %s140
      %p146 = scmp.eq.s32.totalorder %s17, 0
      %p147 = por %p145, %p146
      %p148 = scmp.ne.s32.totalorder %s137, %s140
      %p149 = scmp.eq.s32.totalorder %s22, 1
      %p150 = por %p148, %p149
      %p151 = scmp.ne.s32.totalorder %s140, %s141
      %p152 = scmp.eq.s32.totalorder %s22, 0
      %p153 = por %p151, %p152
      %p154 = scmp.ne.s32.totalorder %s140, %s141
      %p155 = scmp.eq.s32.totalorder %s23, 1
      %p156 = por %p154, %p155
      %p158 = scmp.ne.s32.totalorder %s141, %s157
      %p159 = scmp.eq.s32.totalorder %s23, 0
      %p160 = por %p158, %p159
      %p161 = scmp.le.s32.totalorder 1, %s17
      %p162 = scmp.lt.s32.totalorder %s17, 3
      %p163 = pnand %p161, %p162
      %p164 = pneg %p163
      // Predicated region
      $region9: #{tpu_custom_call.1} parent=5 // pred_check
        _
      $region10: #{tpu_custom_call.1} parent=5 // pred_check_branch
        %166 = sbr.rel (%p163) target = $region12
      $region11: #{tpu_custom_call.1} parent=5 // pred_region
        %s167 = ssub.s32 %s17, 1
        // Predicated region
        $region13: #{tpu_custom_call.1} parent=11 // pred_check
          %p168 = pneg %p64
        $region14: #{tpu_custom_call.1} parent=11 // pred_check_branch
          %170 = sbr.rel (%p168) target = $region16
        $region15: #{tpu_custom_call.1} parent=11 // pred_region
          _
        $region16: #{tpu_custom_call.1} parent=11 // pred_fallthru
          _
        // Predicated region
        $region17: #{tpu_custom_call.1} parent=11 // pred_check
          %p171 = pneg %p85
        $region18: #{tpu_custom_call.1} parent=11 // pred_check_branch
          %173 = sbr.rel (%p171) target = $region20
        $region19: #{tpu_custom_call.1} parent=11 // pred_region
          _
        $region20: #{tpu_custom_call.1} parent=11 // pred_fallthru
          _
        // Predicated region
        $region21: #{tpu_custom_call.1} parent=11 // pred_check
          %p174 = pneg %p106
        $region22: #{tpu_custom_call.1} parent=11 // pred_check_branch
          %176 = sbr.rel (%p174) target = $region24
        $region23: #{tpu_custom_call.1} parent=11 // pred_region
          _
        $region24: #{tpu_custom_call.1} parent=11 // pred_fallthru
          _
        // Predicated region
        $region25: #{tpu_custom_call.1} parent=11 // pred_check
          %p177 = pneg %p127
        $region26: #{tpu_custom_call.1} parent=11 // pred_check_branch
          %179 = sbr.rel (%p177) target = $region28
        $region27: #{tpu_custom_call.1} parent=11 // pred_region
          _
        $region28: #{tpu_custom_call.1} parent=11 // pred_fallthru
          _
      $region12: #{tpu_custom_call.1} parent=5 // pred_fallthru
        _
      %p180 = scmp.lt.s32.totalorder %s17, 2
      // Predicated region
      $region29: #{tpu_custom_call.1} parent=5 // pred_check
        %p181 = pneg %p180
      $region30: #{tpu_custom_call.1} parent=5 // pred_check_branch
        %183 = sbr.rel (%p181) target = $region32
      $region31: #{tpu_custom_call.1} parent=5 // pred_region
        // Predicated region
        $region33: #{tpu_custom_call.1} parent=31 // pred_check
          %p184 = pneg %p37
        $region34: #{tpu_custom_call.1} parent=31 // pred_check_branch
          %186 = sbr.rel (%p184) target = $region36
        $region35: #{tpu_custom_call.1} parent=31 // pred_region
          %s187 = sand.u32 %s27, 1
          %s188 = scalar_lea.sflag [#allocation3], %s187
          %s189 = sand.u32 %s27, 1
          %s190 = smul.addr %s189, 512
          %s191 = scalar_lea.vmem [#allocation2], %s190
          %s192 = smul.u32 2, %s17
          %s194 = ssub.s32 8192, 8192
          %195 = vsyncadd %s188, %s194
          %s196 = smul.addr %s192, 32
          %s197 = smul.addr %s196, 128
          %s198 = scalar_lea.hbm %s0, %s197
          %s199 = sshll.u32 %s191, 4
          %s200 = int_to_ptr.vmem [resolvable:$true] %s199
          %205 = dma.hbm_to_vmem [thread:$0]  %s198, 8192, %s200, %s188, 256, 256, 16
        $region36: #{tpu_custom_call.1} parent=31 // pred_fallthru
          _
      $region32: #{tpu_custom_call.1} parent=5 // pred_fallthru
        _
      %p206 = scmp.le.s32.totalorder 1, %s17
      %p207 = scmp.lt.s32.totalorder %s17, 3
      %p208 = pnand %p206, %p207
      %p209 = pneg %p208
      // Predicated region
      $region37: #{tpu_custom_call.1} parent=5 // pred_check
        _
      $region38: #{tpu_custom_call.1} parent=5 // pred_check_branch
        %211 = sbr.rel (%p208) target = $region40
      $region39: #{tpu_custom_call.1} parent=5 // pred_region
        %s212 = ssub.s32 %s17, 1
        %s213 = sand.u32 %s30, 1
        %s214 = scalar_lea.sflag [#allocation3], %s213
        %s215 = sand.u32 %s30, 1
        %s216 = smul.addr %s215, 512
        %s217 = scalar_lea.vmem [#allocation2], %s216
        // Predicated region
        $region41: #{tpu_custom_call.1} parent=39 // pred_check
          %p218 = pneg %p43
        $region42: #{tpu_custom_call.1} parent=39 // pred_check_branch
          %220 = sbr.rel (%p218) target = $region44
        $region43: #{tpu_custom_call.1} parent=39 // pred_region
          %221 = dma.done %s214, 8192
        $region44: #{tpu_custom_call.1} parent=39 // pred_fallthru
          _
        %s222 = sand.u32 %s30, 1
        %s223 = scalar_lea.sflag [#allocation3], %s222
        %s224 = sand.u32 %s30, 1
        %s225 = smul.addr %s224, 512
        %s226 = scalar_lea.vmem [#allocation2], %s225
        %p227 = pneg %p43
        %p228 = pneg %p40
        %p229 = pneg %p64
        %p230 = pneg %p61
        %p231 = pneg %p85
        %p232 = pneg %p82
        %p233 = pneg %p106
        %p234 = pneg %p103
        %p235 = pneg %p127
        %p236 = pneg %p124
        %p237 = pneg %p153
        %p238 = pneg %p150
        %s239 = sand.u32 %s140, 1
        %s240 = scalar_lea.sflag [#allocation4], %s239
        %s241 = sand.u32 %s140, 1
        %s242 = smul.addr %s241, 512
        %s243 = scalar_lea.vmem [#allocation5], %s242
        %s244 = smul.u32 2, %s22
        %s245 = smul.u32 2, %s22
        %v246 = vld [vmem:[%s217] sm:$0xff]
        %v247 = vld [vmem:[%s217 + $0x8] sm:$0xff]
        %v248 = vld [vmem:[%s217 + $0x10] sm:$0xff]
        %v249 = vld [vmem:[%s217 + $0x18] sm:$0xff]
        %v250 = vld [vmem:[%s217 + $0x20] sm:$0xff]
        %v251 = vld [vmem:[%s217 + $0x28] sm:$0xff]
        %v252 = vld [vmem:[%s217 + $0x30] sm:$0xff]
        %v253 = vld [vmem:[%s217 + $0x38] sm:$0xff]
        %v254 = vld [vmem:[%s217 + $0x40] sm:$0xff]
        %v255 = vld [vmem:[%s217 + $0x48] sm:$0xff]
        %v256 = vld [vmem:[%s217 + $0x50] sm:$0xff]
        %v257 = vld [vmem:[%s217 + $0x58] sm:$0xff]
        %v258 = vld [vmem:[%s217 + $0x60] sm:$0xff]
        %v259 = vld [vmem:[%s217 + $0x68] sm:$0xff]
        %v260 = vld [vmem:[%s217 + $0x70] sm:$0xff]
        %v261 = vld [vmem:[%s217 + $0x78] sm:$0xff]
        %v262 = vld [vmem:[%s217 + $0x80] sm:$0xff]
        %v263 = vld [vmem:[%s217 + $0x88] sm:$0xff]
        %v264 = vld [vmem:[%s217 + $0x90] sm:$0xff]
        %v265 = vld [vmem:[%s217 + $0x98] sm:$0xff]
        %v266 = vld [vmem:[%s217 + $0xa0] sm:$0xff]
        %v267 = vld [vmem:[%s217 + $0xa8] sm:$0xff]
        %v268 = vld [vmem:[%s217 + $0xb0] sm:$0xff]
        %v269 = vld [vmem:[%s217 + $0xb8] sm:$0xff]
        %v270 = vld [vmem:[%s217 + $0xc0] sm:$0xff]
        %v271 = vld [vmem:[%s217 + $0xc8] sm:$0xff]
        %v272 = vld [vmem:[%s217 + $0xd0] sm:$0xff]
        %v273 = vld [vmem:[%s217 + $0xd8] sm:$0xff]
        %v274 = vld [vmem:[%s217 + $0xe0] sm:$0xff]
        %v275 = vld [vmem:[%s217 + $0xe8] sm:$0xff]
        %v276 = vld [vmem:[%s217 + $0xf0] sm:$0xff]
        %v277 = vld [vmem:[%s217 + $0xf8] sm:$0xff]
        %v278 = vld [vmem:[%s217 + $0x100] sm:$0xff]
        %v279 = vld [vmem:[%s217 + $0x108] sm:$0xff]
        %v280 = vld [vmem:[%s217 + $0x110] sm:$0xff]
        %v281 = vld [vmem:[%s217 + $0x118] sm:$0xff]
        %v282 = vld [vmem:[%s217 + $0x120] sm:$0xff]
        %v283 = vld [vmem:[%s217 + $0x128] sm:$0xff]
        %v284 = vld [vmem:[%s217 + $0x130] sm:$0xff]
        %v285 = vld [vmem:[%s217 + $0x138] sm:$0xff]
        %v286 = vld [vmem:[%s217 + $0x140] sm:$0xff]
        %v287 = vld [vmem:[%s217 + $0x148] sm:$0xff]
        %v288 = vld [vmem:[%s217 + $0x150] sm:$0xff]
        %v289 = vld [vmem:[%s217 + $0x158] sm:$0xff]
        %v290 = vld [vmem:[%s217 + $0x160] sm:$0xff]
        %v291 = vld [vmem:[%s217 + $0x168] sm:$0xff]
        %v292 = vld [vmem:[%s217 + $0x170] sm:$0xff]
        %v293 = vld [vmem:[%s217 + $0x178] sm:$0xff]
        %v294 = vld [vmem:[%s217 + $0x180] sm:$0xff]
        %v295 = vld [vmem:[%s217 + $0x188] sm:$0xff]
        %v296 = vld [vmem:[%s217 + $0x190] sm:$0xff]
        %v297 = vld [vmem:[%s217 + $0x198] sm:$0xff]
        %v298 = vld [vmem:[%s217 + $0x1a0] sm:$0xff]
        %v299 = vld [vmem:[%s217 + $0x1a8] sm:$0xff]
        %v300 = vld [vmem:[%s217 + $0x1b0] sm:$0xff]
        %v301 = vld [vmem:[%s217 + $0x1b8] sm:$0xff]
        %v302 = vld [vmem:[%s217 + $0x1c0] sm:$0xff]
        %v303 = vld [vmem:[%s217 + $0x1c8] sm:$0xff]
        %v304 = vld [vmem:[%s217 + $0x1d0] sm:$0xff]
        %v305 = vld [vmem:[%s217 + $0x1d8] sm:$0xff]
        %v306 = vld [vmem:[%s217 + $0x1e0] sm:$0xff]
        %v307 = vld [vmem:[%s217 + $0x1e8] sm:$0xff]
        %v308 = vld [vmem:[%s217 + $0x1f0] sm:$0xff]
        %v309 = vld [vmem:[%s217 + $0x1f8] sm:$0xff]
        %v310 = vadd.f32 %v246, %v247
        %311 = vadd.xlane.f32.xlu0 %v310
        %v312 = vpop.xlane.xlu0 %311
        %v313 = vadd.f32 %v248, %v249
        %314 = vadd.xlane.f32.xlu0 %v313
        %v315 = vpop.xlane.xlu0 %314
        %v316 = vadd.f32 %v250, %v251
        %317 = vadd.xlane.f32.xlu0 %v316
        %v318 = vpop.xlane.xlu0 %317
        %v319 = vadd.f32 %v252, %v253
        %320 = vadd.xlane.f32.xlu0 %v319
        %v321 = vpop.xlane.xlu0 %320
        %v322 = vadd.f32 %v254, %v255
        %323 = vadd.xlane.f32.xlu0 %v322
        %v324 = vpop.xlane.xlu0 %323
        %v325 = vadd.f32 %v256, %v257
        %326 = vadd.xlane.f32.xlu0 %v325
        %v327 = vpop.xlane.xlu0 %326
        %v328 = vadd.f32 %v258, %v259
        %329 = vadd.xlane.f32.xlu0 %v328
        %v330 = vpop.xlane.xlu0 %329
        %v331 = vadd.f32 %v260, %v261
        %332 = vadd.xlane.f32.xlu0 %v331
        %v333 = vpop.xlane.xlu0 %332
        %v334 = vadd.f32 %v262, %v263
        %335 = vadd.xlane.f32.xlu0 %v334
        %v336 = vpop.xlane.xlu0 %335
        %v337 = vadd.f32 %v264, %v265
        %338 = vadd.xlane.f32.xlu0 %v337
        %v339 = vpop.xlane.xlu0 %338
        %v340 = vadd.f32 %v266, %v267
        %341 = vadd.xlane.f32.xlu0 %v340
        %v342 = vpop.xlane.xlu0 %341
        %v343 = vadd.f32 %v268, %v269
        %344 = vadd.xlane.f32.xlu0 %v343
        %v345 = vpop.xlane.xlu0 %344
        %v346 = vadd.f32 %v270, %v271
        %347 = vadd.xlane.f32.xlu0 %v346
        %v348 = vpop.xlane.xlu0 %347
        %v349 = vadd.f32 %v272, %v273
        %350 = vadd.xlane.f32.xlu0 %v349
        %v351 = vpop.xlane.xlu0 %350
        %v352 = vadd.f32 %v274, %v275
        %353 = vadd.xlane.f32.xlu0 %v352
        %v354 = vpop.xlane.xlu0 %353
        %v355 = vadd.f32 %v276, %v277
        %356 = vadd.xlane.f32.xlu0 %v355
        %v357 = vpop.xlane.xlu0 %356
        %v358 = vadd.f32 %v278, %v279
        %359 = vadd.xlane.f32.xlu0 %v358
        %v360 = vpop.xlane.xlu0 %359
        %v361 = vadd.f32 %v280, %v281
        %362 = vadd.xlane.f32.xlu0 %v361
        %v363 = vpop.xlane.xlu0 %362
        %v364 = vadd.f32 %v282, %v283
        %365 = vadd.xlane.f32.xlu0 %v364
        %v366 = vpop.xlane.xlu0 %365
        %v367 = vadd.f32 %v284, %v285
        %368 = vadd.xlane.f32.xlu0 %v367
        %v369 = vpop.xlane.xlu0 %368
        %v370 = vadd.f32 %v286, %v287
        %371 = vadd.xlane.f32.xlu0 %v370
        %v372 = vpop.xlane.xlu0 %371
        %v373 = vadd.f32 %v288, %v289
        %374 = vadd.xlane.f32.xlu0 %v373
        %v375 = vpop.xlane.xlu0 %374
        %v376 = vadd.f32 %v290, %v291
        %377 = vadd.xlane.f32.xlu0 %v376
        %v378 = vpop.xlane.xlu0 %377
        %v379 = vadd.f32 %v292, %v293
        %380 = vadd.xlane.f32.xlu0 %v379
        %v381 = vpop.xlane.xlu0 %380
        %v382 = vadd.f32 %v294, %v295
        %383 = vadd.xlane.f32.xlu0 %v382
        %v384 = vpop.xlane.xlu0 %383
        %v385 = vadd.f32 %v296, %v297
        %386 = vadd.xlane.f32.xlu0 %v385
        %v387 = vpop.xlane.xlu0 %386
        %v388 = vadd.f32 %v298, %v299
        %389 = vadd.xlane.f32.xlu0 %v388
        %v390 = vpop.xlane.xlu0 %389
        %v391 = vadd.f32 %v300, %v301
        %392 = vadd.xlane.f32.xlu0 %v391
        %v393 = vpop.xlane.xlu0 %392
        %v394 = vadd.f32 %v302, %v303
        %395 = vadd.xlane.f32.xlu0 %v394
        %v396 = vpop.xlane.xlu0 %395
        %v397 = vadd.f32 %v304, %v305
        %398 = vadd.xlane.f32.xlu0 %v397
        %v399 = vpop.xlane.xlu0 %398
        %v400 = vadd.f32 %v306, %v307
        %401 = vadd.xlane.f32.xlu0 %v400
        %v402 = vpop.xlane.xlu0 %401
        %v403 = vadd.f32 %v308, %v309
        %404 = vadd.xlane.f32.xlu0 %v403
        %v405 = vpop.xlane.xlu0 %404
        %v406 = vmul.f32 %v312, 0.00390625
        %v407 = vmul.f32 %v315, 0.00390625
        %v408 = vmul.f32 %v318, 0.00390625
        %v409 = vmul.f32 %v321, 0.00390625
        %v410 = vmul.f32 %v324, 0.00390625
        %v411 = vmul.f32 %v327, 0.00390625
        %v412 = vmul.f32 %v330, 0.00390625
        %v413 = vmul.f32 %v333, 0.00390625
        %v414 = vmul.f32 %v336, 0.00390625
        %v415 = vmul.f32 %v339, 0.00390625
        %v416 = vmul.f32 %v342, 0.00390625
        %v417 = vmul.f32 %v345, 0.00390625
        %v418 = vmul.f32 %v348, 0.00390625
        %v419 = vmul.f32 %v351, 0.00390625
        %v420 = vmul.f32 %v354, 0.00390625
        %v421 = vmul.f32 %v357, 0.00390625
        %v422 = vmul.f32 %v360, 0.00390625
        %v423 = vmul.f32 %v363, 0.00390625
        %v424 = vmul.f32 %v366, 0.00390625
        %v425 = vmul.f32 %v369, 0.00390625
        %v426 = vmul.f32 %v372, 0.00390625
        %v427 = vmul.f32 %v375, 0.00390625
        %v428 = vmul.f32 %v378, 0.00390625
        %v429 = vmul.f32 %v381, 0.00390625
        %v430 = vmul.f32 %v384, 0.00390625
        %v431 = vmul.f32 %v387, 0.00390625
        %v432 = vmul.f32 %v390, 0.00390625
        %v433 = vmul.f32 %v393, 0.00390625
        %v434 = vmul.f32 %v396, 0.00390625
        %v435 = vmul.f32 %v399, 0.00390625
        %v436 = vmul.f32 %v402, 0.00390625
        %v437 = vmul.f32 %v405, 0.00390625
        %v438 = vld [vmem:[%s1] sm:$0xff]
        %v439 = vld [vmem:[%s1 + $0x8] sm:$0xff]
        %v440 = vld [vmem:[%s1 + $0x10] sm:$0xff]
        %v441 = vld [vmem:[%s1 + $0x18] sm:$0xff]
        %v442 = vld [vmem:[%s1 + $0x20] sm:$0xff]
        %v443 = vld [vmem:[%s1 + $0x28] sm:$0xff]
        %v444 = vld [vmem:[%s1 + $0x30] sm:$0xff]
        %v445 = vld [vmem:[%s1 + $0x38] sm:$0xff]
        %v446 = vld [vmem:[%s1 + $0x40] sm:$0xff]
        %v447 = vld [vmem:[%s1 + $0x48] sm:$0xff]
        %v448 = vld [vmem:[%s1 + $0x50] sm:$0xff]
        %v449 = vld [vmem:[%s1 + $0x58] sm:$0xff]
        %v450 = vld [vmem:[%s1 + $0x60] sm:$0xff]
        %v451 = vld [vmem:[%s1 + $0x68] sm:$0xff]
        %v452 = vld [vmem:[%s1 + $0x70] sm:$0xff]
        %v453 = vld [vmem:[%s1 + $0x78] sm:$0xff]
        %v454 = vld [vmem:[%s2] sm:$0x1]
        %v456 = vlaneseq
        %v457 = vshrl.u32 %v456, 7
        %v458 = vsub.s32 0, %v457
        %v459 = vrot.slane %v454, %v458
        %v493 = vlaneseq
        %v494 = vand.u32 %v493, 127
        %v495 = vlaneseq
        %v496 = vshrl.u32 %v495, 7
        %v497 = vsub.s32 %v494, %v496
        %v498 = vrot.slane %v406, %v497
        %v499 = vadd.s32 %v494, 4294967288
        %v500 = vlaneseq
        %v501 = vshrl.u32 %v500, 7
        %v502 = vsub.s32 %v499, %v501
        %v503 = vrot.slane %v407, %v502
        %vm504 = vcmask 130112
        %v505 = vsel %vm504, %v503, %v498
        %v506 = vadd.s32 %v494, 4294967280
        %v507 = vlaneseq
        %v508 = vshrl.u32 %v507, 7
        %v509 = vsub.s32 %v506, %v508
        %v510 = vrot.slane %v408, %v509
        %vm511 = vcmask 195712
        %v512 = vsel %vm511, %v510, %v505
        %v513 = vadd.s32 %v494, 4294967272
        %v514 = vlaneseq
        %v515 = vshrl.u32 %v514, 7
        %v516 = vsub.s32 %v513, %v515
        %v517 = vrot.slane %v409, %v516
        %vm518 = vcmask 261312
        %v519 = vsel %vm518, %v517, %v512
        %v520 = vadd.s32 %v494, 4294967264
        %v521 = vlaneseq
        %v522 = vshrl.u32 %v521, 7
        %v523 = vsub.s32 %v520, %v522
        %v524 = vrot.slane %v410, %v523
        %vm525 = vcmask 326912
        %v526 = vsel %vm525, %v524, %v519
        %v527 = vadd.s32 %v494, 4294967256
        %v528 = vlaneseq
        %v529 = vshrl.u32 %v528, 7
        %v530 = vsub.s32 %v527, %v529
        %v531 = vrot.slane %v411, %v530
        %vm532 = vcmask 392512
        %v533 = vsel %vm532, %v531, %v526
        %v534 = vadd.s32 %v494, 4294967248
        %v535 = vlaneseq
        %v536 = vshrl.u32 %v535, 7
        %v537 = vsub.s32 %v534, %v536
        %v538 = vrot.slane %v412, %v537
        %vm539 = vcmask 458112
        %v540 = vsel %vm539, %v538, %v533
        %v541 = vadd.s32 %v494, 4294967240
        %v542 = vlaneseq
        %v543 = vshrl.u32 %v542, 7
        %v544 = vsub.s32 %v541, %v543
        %v545 = vrot.slane %v413, %v544
        %vm546 = vcmask 523712
        %v547 = vsel %vm546, %v545, %v540
        %v548 = vadd.s32 %v494, 4294967232
        %v549 = vlaneseq
        %v550 = vshrl.u32 %v549, 7
        %v551 = vsub.s32 %v548, %v550
        %v552 = vrot.slane %v414, %v551
        %vm553 = vcmask 589312
        %v554 = vsel %vm553, %v552, %v547
        %v555 = vadd.s32 %v494, 4294967224
        %v556 = vlaneseq
        %v557 = vshrl.u32 %v556, 7
        %v558 = vsub.s32 %v555, %v557
        %v559 = vrot.slane %v415, %v558
        %vm560 = vcmask 654912
        %v561 = vsel %vm560, %v559, %v554
        %v562 = vadd.s32 %v494, 4294967216
        %v563 = vlaneseq
        %v564 = vshrl.u32 %v563, 7
        %v565 = vsub.s32 %v562, %v564
        %v566 = vrot.slane %v416, %v565
        %vm567 = vcmask 720512
        %v568 = vsel %vm567, %v566, %v561
        %v569 = vadd.s32 %v494, 4294967208
        %v570 = vlaneseq
        %v571 = vshrl.u32 %v570, 7
        %v572 = vsub.s32 %v569, %v571
        %v573 = vrot.slane %v417, %v572
        %vm574 = vcmask 786112
        %v575 = vsel %vm574, %v573, %v568
        %v576 = vadd.s32 %v494, 4294967200
        %v577 = vlaneseq
        %v578 = vshrl.u32 %v577, 7
        %v579 = vsub.s32 %v576, %v578
        %v580 = vrot.slane %v418, %v579
        %vm581 = vcmask 851712
        %v582 = vsel %vm581, %v580, %v575
        %v583 = vadd.s32 %v494, 4294967192
        %v584 = vlaneseq
        %v585 = vshrl.u32 %v584, 7
        %v586 = vsub.s32 %v583, %v585
        %v587 = vrot.slane %v419, %v586
        %vm588 = vcmask 917312
        %v589 = vsel %vm588, %v587, %v582
        %v590 = vadd.s32 %v494, 4294967184
        %v591 = vlaneseq
        %v592 = vshrl.u32 %v591, 7
        %v593 = vsub.s32 %v590, %v592
        %v594 = vrot.slane %v420, %v593
        %vm595 = vcmask 982912
        %v596 = vsel %vm595, %v594, %v589
        %v597 = vadd.s32 %v494, 4294967176
        %v598 = vlaneseq
        %v599 = vshrl.u32 %v598, 7
        %v600 = vsub.s32 %v597, %v599
        %v601 = vrot.slane %v421, %v600
        %vm602 = vcmask 1048512
        %v603 = vsel %vm602, %v601, %v596
        %v604 = vlaneseq
        %v605 = vshrl.u32 %v604, 7
        %v606 = vsub.s32 %v494, %v605
        %v607 = vrot.slane %v422, %v606
        %v608 = vlaneseq
        %v609 = vshrl.u32 %v608, 7
        %v610 = vsub.s32 %v499, %v609
        %v611 = vrot.slane %v423, %v610
        %v612 = vsel %vm504, %v611, %v607
        %v613 = vlaneseq
        %v614 = vshrl.u32 %v613, 7
        %v615 = vsub.s32 %v506, %v614
        %v616 = vrot.slane %v424, %v615
        %v617 = vsel %vm511, %v616, %v612
        %v618 = vlaneseq
        %v619 = vshrl.u32 %v618, 7
        %v620 = vsub.s32 %v513, %v619
        %v621 = vrot.slane %v425, %v620
        %v622 = vsel %vm518, %v621, %v617
        %v623 = vlaneseq
        %v624 = vshrl.u32 %v623, 7
        %v625 = vsub.s32 %v520, %v624
        %v626 = vrot.slane %v426, %v625
        %v627 = vsel %vm525, %v626, %v622
        %v628 = vlaneseq
        %v629 = vshrl.u32 %v628, 7
        %v630 = vsub.s32 %v527, %v629
        %v631 = vrot.slane %v427, %v630
        %v632 = vsel %vm532, %v631, %v627
        %v633 = vlaneseq
        %v634 = vshrl.u32 %v633, 7
        %v635 = vsub.s32 %v534, %v634
        %v636 = vrot.slane %v428, %v635
        %v637 = vsel %vm539, %v636, %v632
        %v638 = vlaneseq
        %v639 = vshrl.u32 %v638, 7
        %v640 = vsub.s32 %v541, %v639
        %v641 = vrot.slane %v429, %v640
        %v642 = vsel %vm546, %v641, %v637
        %v643 = vlaneseq
        %v644 = vshrl.u32 %v643, 7
        %v645 = vsub.s32 %v548, %v644
        %v646 = vrot.slane %v430, %v645
        %v647 = vsel %vm553, %v646, %v642
        %v648 = vlaneseq
        %v649 = vshrl.u32 %v648, 7
        %v650 = vsub.s32 %v555, %v649
        %v651 = vrot.slane %v431, %v650
        %v652 = vsel %vm560, %v651, %v647
        %v653 = vlaneseq
        %v654 = vshrl.u32 %v653, 7
        %v655 = vsub.s32 %v562, %v654
        %v656 = vrot.slane %v432, %v655
        %v657 = vsel %vm567, %v656, %v652
        %v658 = vlaneseq
        %v659 = vshrl.u32 %v658, 7
        %v660 = vsub.s32 %v569, %v659
        %v661 = vrot.slane %v433, %v660
        %v662 = vsel %vm574, %v661, %v657
        %v663 = vlaneseq
        %v664 = vshrl.u32 %v663, 7
        %v665 = vsub.s32 %v576, %v664
        %v666 = vrot.slane %v434, %v665
        %v667 = vsel %vm581, %v666, %v662
        %v668 = vlaneseq
        %v669 = vshrl.u32 %v668, 7
        %v670 = vsub.s32 %v583, %v669
        %v671 = vrot.slane %v435, %v670
        %v672 = vsel %vm588, %v671, %v667
        %v673 = vlaneseq
        %v674 = vshrl.u32 %v673, 7
        %v675 = vsub.s32 %v590, %v674
        %v676 = vrot.slane %v436, %v675
        %v677 = vsel %vm595, %v676, %v672
        %v678 = vlaneseq
        %v679 = vshrl.u32 %v678, 7
        %v680 = vsub.s32 %v597, %v679
        %v681 = vrot.slane %v437, %v680
        %v682 = vsel %vm602, %v681, %v677
        %vm683 = vcmask 1041409
        %v684 = vsel %vm683, %v682, %v603
        %686 = vmatprep.subr.mxu0 0.0
        %687 = vmatpush1.msra.mxu0 %v438
        %688 = vmatprep.subr.mxu0 0.0
        %689 = vmatpush1.msra.mxu0 %v439
        %690 = vmatprep.subr.mxu0 0.0
        %691 = vmatpush1.msra.mxu0 %v440
        %692 = vmatprep.subr.mxu0 0.0
        %693 = vmatpush1.msra.mxu0 %v441
        %694 = vmatprep.subr.mxu0 0.0
        %695 = vmatpush1.msra.mxu0 %v442
        %696 = vmatprep.subr.mxu0 0.0
        %697 = vmatpush1.msra.mxu0 %v443
        %698 = vmatprep.subr.mxu0 0.0
        %699 = vmatpush1.msra.mxu0 %v444
        %700 = vmatprep.subr.mxu0 0.0
        %701 = vmatpush1.msra.mxu0 %v445
        %702 = vmatprep.subr.mxu0 0.0
        %703 = vmatpush1.msra.mxu0 %v446
        %704 = vmatprep.subr.mxu0 0.0
        %705 = vmatpush1.msra.mxu0 %v447
        %706 = vmatprep.subr.mxu0 0.0
        %707 = vmatpush1.msra.mxu0 %v448
        %708 = vmatprep.subr.mxu0 0.0
        %709 = vmatpush1.msra.mxu0 %v449
        %710 = vmatprep.subr.mxu0 0.0
        %711 = vmatpush1.msra.mxu0 %v450
        %712 = vmatprep.subr.mxu0 0.0
        %713 = vmatpush1.msra.mxu0 %v451
        %714 = vmatprep.subr.mxu0 0.0
        %715 = vmatpush1.msra.mxu0 %v452
        %716 = vmatprep.subr.mxu0 0.0
        %717 = vmatpush1.msra.mxu0 %v453
        %718 = vmatprep.subr.mxu0 0.0
        %719 = vmatpush1.msra.mxu0 0.0
        %720 = vmatprep.subr.mxu0 0.0
        %721 = vmatpush1.msra.mxu0 0.0
        %722 = vmatprep.subr.mxu0 0.0
        %723 = vmatpush1.msra.mxu0 0.0
        %724 = vmatprep.subr.mxu0 0.0
        %725 = vmatpush1.msra.mxu0 0.0
        %726 = vmatprep.subr.mxu0 0.0
        %727 = vmatpush1.msra.mxu0 0.0
        %728 = vmatprep.subr.mxu0 0.0
        %729 = vmatpush1.msra.mxu0 0.0
        %730 = vmatprep.subr.mxu0 0.0
        %731 = vmatpush1.msra.mxu0 0.0
        %732 = vmatprep.subr.mxu0 0.0
        %733 = vmatpush1.msra.mxu0 0.0
        %734 = vmatprep.subr.mxu0 0.0
        %735 = vmatpush1.msra.mxu0 0.0
        %736 = vmatprep.subr.mxu0 0.0
        %737 = vmatpush1.msra.mxu0 0.0
        %738 = vmatprep.subr.mxu0 0.0
        %739 = vmatpush1.msra.mxu0 0.0
        %740 = vmatprep.subr.mxu0 0.0
        %741 = vmatpush1.msra.mxu0 0.0
        %742 = vmatprep.subr.mxu0 0.0
        %743 = vmatpush1.msra.mxu0 0.0
        %744 = vmatprep.subr.mxu0 0.0
        %745 = vmatpush1.msra.mxu0 0.0
        %746 = vmatprep.subr.mxu0 0.0
        %747 = vmatpush1.msra.mxu0 0.0
        %748 = vmatprep.subr.mxu0 0.0
        %749 = vmatpush1.msra.mxu0 0.0
        %750 = vmatprep.mubr.f32.mxu0 0.0
        %751 = vmatmul.mubr.f32.gmra.mrb[0].mxu0 %v684
        %v752 = vpop.f32.mrb[0].mxu0
        %v753 = vadd.f32 %v459, %v752
        %v754 = vpop.f32.mrb[0].mxu0
        %755 = vdwg.mxu0
        %v756 = vmax.f32 %v753, 0.0
        %v757 = vld [vmem:[%s3] sm:$0xff]
        %v758 = vld [vmem:[%s4] sm:$0x1]
        %v760 = vlaneseq
        %v761 = vshrl.u32 %v760, 7
        %v762 = vsub.s32 0, %v761
        %v763 = vrot.slane %v758, %v762
        %vm765 = vcmask 64512
        %v767 = vsel %vm765, %v756, 0
        %769 = vmatprep.subr.mxu0 0.0
        %770 = vmatpush1.msra.mxu0 %v757
        %771 = vmatprep.subr.mxu0 0.0
        %772 = vmatpush1.msra.mxu0 0.0
        %773 = vmatprep.subr.mxu0 0.0
        %774 = vmatpush1.msra.mxu0 0.0
        %775 = vmatprep.subr.mxu0 0.0
        %776 = vmatpush1.msra.mxu0 0.0
        %777 = vmatprep.subr.mxu0 0.0
        %778 = vmatpush1.msra.mxu0 0.0
        %779 = vmatprep.subr.mxu0 0.0
        %780 = vmatpush1.msra.mxu0 0.0
        %781 = vmatprep.subr.mxu0 0.0
        %782 = vmatpush1.msra.mxu0 0.0
        %783 = vmatprep.subr.mxu0 0.0
        %784 = vmatpush1.msra.mxu0 0.0
        %785 = vmatprep.subr.mxu0 0.0
        %786 = vmatpush1.msra.mxu0 0.0
        %787 = vmatprep.subr.mxu0 0.0
        %788 = vmatpush1.msra.mxu0 0.0
        %789 = vmatprep.subr.mxu0 0.0
        %790 = vmatpush1.msra.mxu0 0.0
        %791 = vmatprep.subr.mxu0 0.0
        %792 = vmatpush1.msra.mxu0 0.0
        %793 = vmatprep.subr.mxu0 0.0
        %794 = vmatpush1.msra.mxu0 0.0
        %795 = vmatprep.subr.mxu0 0.0
        %796 = vmatpush1.msra.mxu0 0.0
        %797 = vmatprep.subr.mxu0 0.0
        %798 = vmatpush1.msra.mxu0 0.0
        %799 = vmatprep.subr.mxu0 0.0
        %800 = vmatpush1.msra.mxu0 0.0
        %801 = vmatprep.subr.mxu0 0.0
        %802 = vmatpush1.msra.mxu0 0.0
        %803 = vmatprep.subr.mxu0 0.0
        %804 = vmatpush1.msra.mxu0 0.0
        %805 = vmatprep.subr.mxu0 0.0
        %806 = vmatpush1.msra.mxu0 0.0
        %807 = vmatprep.subr.mxu0 0.0
        %808 = vmatpush1.msra.mxu0 0.0
        %809 = vmatprep.subr.mxu0 0.0
        %810 = vmatpush1.msra.mxu0 0.0
        %811 = vmatprep.subr.mxu0 0.0
        %812 = vmatpush1.msra.mxu0 0.0
        %813 = vmatprep.subr.mxu0 0.0
        %814 = vmatpush1.msra.mxu0 0.0
        %815 = vmatprep.subr.mxu0 0.0
        %816 = vmatpush1.msra.mxu0 0.0
        %817 = vmatprep.subr.mxu0 0.0
        %818 = vmatpush1.msra.mxu0 0.0
        %819 = vmatprep.subr.mxu0 0.0
        %820 = vmatpush1.msra.mxu0 0.0
        %821 = vmatprep.subr.mxu0 0.0
        %822 = vmatpush1.msra.mxu0 0.0
        %823 = vmatprep.subr.mxu0 0.0
        %824 = vmatpush1.msra.mxu0 0.0
        %825 = vmatprep.subr.mxu0 0.0
        %826 = vmatpush1.msra.mxu0 0.0
        %827 = vmatprep.subr.mxu0 0.0
        %828 = vmatpush1.msra.mxu0 0.0
        %829 = vmatprep.subr.mxu0 0.0
        %830 = vmatpush1.msra.mxu0 0.0
        %831 = vmatprep.subr.mxu0 0.0
        %832 = vmatpush1.msra.mxu0 0.0
        %833 = vmatprep.mubr.f32.mxu0 0.0
        %834 = vmatmul.mubr.f32.gmra.mrb[0].mxu0 %v767
        %v835 = vpop.f32.mrb[0].mxu0
        %v836 = vadd.f32 %v763, %v835
        %v837 = vpop.f32.mrb[0].mxu0
        %838 = vdwg.mxu0
        %v839 = vxor.u32 %v836, 2147483648
        %v840 = vmul.f32 %v839, 1.442695
        %v841 = vpow.pop %v840
        %v842 = vadd.f32 %v841, 1.0
        %v843 = vrcp.pop %v842
        %v844 = vmul.f32 1.0, %v843
        %v845 = vlaneseq
        %v846 = vshrl.u32 %v845, 7
        %v847 = vsub.s32 0, %v846
        %v848 = vrot.slane %v844, %v847
        %850 = vbcast.lane.b32.xlu0 %v848, 256
        %v851 = vpop.permute.xlu0 %850
        %s853 = sor.u32 256, 8
        %854 = vbcast.lane.b32.xlu0 %v848, %s853
        %v855 = vpop.permute.xlu0 %854
        %s857 = sor.u32 256, 16
        %858 = vbcast.lane.b32.xlu0 %v848, %s857
        %v859 = vpop.permute.xlu0 %858
        %s861 = sor.u32 256, 24
        %862 = vbcast.lane.b32.xlu0 %v848, %s861
        %v863 = vpop.permute.xlu0 %862
        %s865 = sor.u32 256, 32
        %866 = vbcast.lane.b32.xlu0 %v848, %s865
        %v867 = vpop.permute.xlu0 %866
        %s869 = sor.u32 256, 40
        %870 = vbcast.lane.b32.xlu0 %v848, %s869
        %v871 = vpop.permute.xlu0 %870
        %s873 = sor.u32 256, 48
        %874 = vbcast.lane.b32.xlu0 %v848, %s873
        %v875 = vpop.permute.xlu0 %874
        %s877 = sor.u32 256, 56
        %878 = vbcast.lane.b32.xlu0 %v848, %s877
        %v879 = vpop.permute.xlu0 %878
        %s881 = sor.u32 256, 64
        %882 = vbcast.lane.b32.xlu0 %v848, %s881
        %v883 = vpop.permute.xlu0 %882
        %s885 = sor.u32 256, 72
        %886 = vbcast.lane.b32.xlu0 %v848, %s885
        %v887 = vpop.permute.xlu0 %886
        %s889 = sor.u32 256, 80
        %890 = vbcast.lane.b32.xlu0 %v848, %s889
        %v891 = vpop.permute.xlu0 %890
        %s893 = sor.u32 256, 88
        %894 = vbcast.lane.b32.xlu0 %v848, %s893
        %v895 = vpop.permute.xlu0 %894
        %s897 = sor.u32 256, 96
        %898 = vbcast.lane.b32.xlu0 %v848, %s897
        %v899 = vpop.permute.xlu0 %898
        %s901 = sor.u32 256, 104
        %902 = vbcast.lane.b32.xlu0 %v848, %s901
        %v903 = vpop.permute.xlu0 %902
        %s905 = sor.u32 256, 112
        %906 = vbcast.lane.b32.xlu0 %v848, %s905
        %v907 = vpop.permute.xlu0 %906
        %s909 = sor.u32 256, 120
        %910 = vbcast.lane.b32.xlu0 %v848, %s909
        %v911 = vpop.permute.xlu0 %910
        %v912 = vlaneseq
        %v913 = vshrl.u32 %v912, 7
        %v914 = vsub.s32 1, %v913
        %v915 = vrot.slane %v844, %v914
        %917 = vbcast.lane.b32.xlu0 %v915, 256
        %v918 = vpop.permute.xlu0 %917
        %s920 = sor.u32 256, 8
        %921 = vbcast.lane.b32.xlu0 %v915, %s920
        %v922 = vpop.permute.xlu0 %921
        %s924 = sor.u32 256, 16
        %925 = vbcast.lane.b32.xlu0 %v915, %s924
        %v926 = vpop.permute.xlu0 %925
        %s928 = sor.u32 256, 24
        %929 = vbcast.lane.b32.xlu0 %v915, %s928
        %v930 = vpop.permute.xlu0 %929
        %s932 = sor.u32 256, 32
        %933 = vbcast.lane.b32.xlu0 %v915, %s932
        %v934 = vpop.permute.xlu0 %933
        %s936 = sor.u32 256, 40
        %937 = vbcast.lane.b32.xlu0 %v915, %s936
        %v938 = vpop.permute.xlu0 %937
        %s940 = sor.u32 256, 48
        %941 = vbcast.lane.b32.xlu0 %v915, %s940
        %v942 = vpop.permute.xlu0 %941
        %s944 = sor.u32 256, 56
        %945 = vbcast.lane.b32.xlu0 %v915, %s944
        %v946 = vpop.permute.xlu0 %945
        %s948 = sor.u32 256, 64
        %949 = vbcast.lane.b32.xlu0 %v915, %s948
        %v950 = vpop.permute.xlu0 %949
        %s952 = sor.u32 256, 72
        %953 = vbcast.lane.b32.xlu0 %v915, %s952
        %v954 = vpop.permute.xlu0 %953
        %s956 = sor.u32 256, 80
        %957 = vbcast.lane.b32.xlu0 %v915, %s956
        %v958 = vpop.permute.xlu0 %957
        %s960 = sor.u32 256, 88
        %961 = vbcast.lane.b32.xlu0 %v915, %s960
        %v962 = vpop.permute.xlu0 %961
        %s964 = sor.u32 256, 96
        %965 = vbcast.lane.b32.xlu0 %v915, %s964
        %v966 = vpop.permute.xlu0 %965
        %s968 = sor.u32 256, 104
        %969 = vbcast.lane.b32.xlu0 %v915, %s968
        %v970 = vpop.permute.xlu0 %969
        %s972 = sor.u32 256, 112
        %973 = vbcast.lane.b32.xlu0 %v915, %s972
        %v974 = vpop.permute.xlu0 %973
        %s976 = sor.u32 256, 120
        %977 = vbcast.lane.b32.xlu0 %v915, %s976
        %v978 = vpop.permute.xlu0 %977
        %v979 = vmul.f32 %v246, %v851
        %v980 = vmul.f32 %v247, %v851
        %v981 = vmul.f32 %v248, %v855
        %v982 = vmul.f32 %v249, %v855
        %v983 = vmul.f32 %v250, %v859
        %v984 = vmul.f32 %v251, %v859
        %v985 = vmul.f32 %v252, %v863
        %v986 = vmul.f32 %v253, %v863
        %v987 = vmul.f32 %v254, %v867
        %v988 = vmul.f32 %v255, %v867
        %v989 = vmul.f32 %v256, %v871
        %v990 = vmul.f32 %v257, %v871
        %v991 = vmul.f32 %v258, %v875
        %v992 = vmul.f32 %v259, %v875
        %v993 = vmul.f32 %v260, %v879
        %v994 = vmul.f32 %v261, %v879
        %v995 = vmul.f32 %v262, %v883
        %v996 = vmul.f32 %v263, %v883
        %v997 = vmul.f32 %v264, %v887
        %v998 = vmul.f32 %v265, %v887
        %v999 = vmul.f32 %v266, %v891
        %v1000 = vmul.f32 %v267, %v891
        %v1001 = vmul.f32 %v268, %v895
        %v1002 = vmul.f32 %v269, %v895
        %v1003 = vmul.f32 %v270, %v899
        %v1004 = vmul.f32 %v271, %v899
        %v1005 = vmul.f32 %v272, %v903
        %v1006 = vmul.f32 %v273, %v903
        %v1007 = vmul.f32 %v274, %v907
        %v1008 = vmul.f32 %v275, %v907
        %v1009 = vmul.f32 %v276, %v911
        %v1010 = vmul.f32 %v277, %v911
        %v1011 = vmul.f32 %v278, %v918
        %v1012 = vmul.f32 %v279, %v918
        %v1013 = vmul.f32 %v280, %v922
        %v1014 = vmul.f32 %v281, %v922
        %v1015 = vmul.f32 %v282, %v926
        %v1016 = vmul.f32 %v283, %v926
        %v1017 = vmul.f32 %v284, %v930
        %v1018 = vmul.f32 %v285, %v930
        %v1019 = vmul.f32 %v286, %v934
        %v1020 = vmul.f32 %v287, %v934
        %v1021 = vmul.f32 %v288, %v938
        %v1022 = vmul.f32 %v289, %v938
        %v1023 = vmul.f32 %v290, %v942
        %v1024 = vmul.f32 %v291, %v942
        %v1025 = vmul.f32 %v292, %v946
        %v1026 = vmul.f32 %v293, %v946
        %v1027 = vmul.f32 %v294, %v950
        %v1028 = vmul.f32 %v295, %v950
        %v1029 = vmul.f32 %v296, %v954
        %v1030 = vmul.f32 %v297, %v954
        %v1031 = vmul.f32 %v298, %v958
        %v1032 = vmul.f32 %v299, %v958
        %v1033 = vmul.f32 %v300, %v962
        %v1034 = vmul.f32 %v301, %v962
        %v1035 = vmul.f32 %v302, %v966
        %v1036 = vmul.f32 %v303, %v966
        %v1037 = vmul.f32 %v304, %v970
        %v1038 = vmul.f32 %v305, %v970
        %v1039 = vmul.f32 %v306, %v974
        %v1040 = vmul.f32 %v307, %v974
        %v1041 = vmul.f32 %v308, %v978
        %v1042 = vmul.f32 %v309, %v978
        %1043 = vst [vmem:[%s243] sm:$0xff] %v979
        %1044 = vst [vmem:[%s243 + $0x8] sm:$0xff] %v980
        %1045 = vst [vmem:[%s243 + $0x10] sm:$0xff] %v981
        %1046 = vst [vmem:[%s243 + $0x18] sm:$0xff] %v982
        %1047 = vst [vmem:[%s243 + $0x20] sm:$0xff] %v983
        %1048 = vst [vmem:[%s243 + $0x28] sm:$0xff] %v984
        %1049 = vst [vmem:[%s243 + $0x30] sm:$0xff] %v985
        %1050 = vst [vmem:[%s243 + $0x38] sm:$0xff] %v986
        %1051 = vst [vmem:[%s243 + $0x40] sm:$0xff] %v987
        %1052 = vst [vmem:[%s243 + $0x48] sm:$0xff] %v988
        %1053 = vst [vmem:[%s243 + $0x50] sm:$0xff] %v989
        %1054 = vst [vmem:[%s243 + $0x58] sm:$0xff] %v990
        %1055 = vst [vmem:[%s243 + $0x60] sm:$0xff] %v991
        %1056 = vst [vmem:[%s243 + $0x68] sm:$0xff] %v992
        %1057 = vst [vmem:[%s243 + $0x70] sm:$0xff] %v993
        %1058 = vst [vmem:[%s243 + $0x78] sm:$0xff] %v994
        %1059 = vst [vmem:[%s243 + $0x80] sm:$0xff] %v995
        %1060 = vst [vmem:[%s243 + $0x88] sm:$0xff] %v996
        %1061 = vst [vmem:[%s243 + $0x90] sm:$0xff] %v997
        %1062 = vst [vmem:[%s243 + $0x98] sm:$0xff] %v998
        %1063 = vst [vmem:[%s243 + $0xa0] sm:$0xff] %v999
        %1064 = vst [vmem:[%s243 + $0xa8] sm:$0xff] %v1000
        %1065 = vst [vmem:[%s243 + $0xb0] sm:$0xff] %v1001
        %1066 = vst [vmem:[%s243 + $0xb8] sm:$0xff] %v1002
        %1067 = vst [vmem:[%s243 + $0xc0] sm:$0xff] %v1003
        %1068 = vst [vmem:[%s243 + $0xc8] sm:$0xff] %v1004
        %1069 = vst [vmem:[%s243 + $0xd0] sm:$0xff] %v1005
        %1070 = vst [vmem:[%s243 + $0xd8] sm:$0xff] %v1006
        %1071 = vst [vmem:[%s243 + $0xe0] sm:$0xff] %v1007
        %1072 = vst [vmem:[%s243 + $0xe8] sm:$0xff] %v1008
        %1073 = vst [vmem:[%s243 + $0xf0] sm:$0xff] %v1009
        %1074 = vst [vmem:[%s243 + $0xf8] sm:$0xff] %v1010
        %1075 = vst [vmem:[%s243 + $0x100] sm:$0xff] %v1011
        %1076 = vst [vmem:[%s243 + $0x108] sm:$0xff] %v1012
        %1077 = vst [vmem:[%s243 + $0x110] sm:$0xff] %v1013
        %1078 = vst [vmem:[%s243 + $0x118] sm:$0xff] %v1014
        %1079 = vst [vmem:[%s243 + $0x120] sm:$0xff] %v1015
        %1080 = vst [vmem:[%s243 + $0x128] sm:$0xff] %v1016
        %1081 = vst [vmem:[%s243 + $0x130] sm:$0xff] %v1017
        %1082 = vst [vmem:[%s243 + $0x138] sm:$0xff] %v1018
        %1083 = vst [vmem:[%s243 + $0x140] sm:$0xff] %v1019
        %1084 = vst [vmem:[%s243 + $0x148] sm:$0xff] %v1020
        %1085 = vst [vmem:[%s243 + $0x150] sm:$0xff] %v1021
        %1086 = vst [vmem:[%s243 + $0x158] sm:$0xff] %v1022
        %1087 = vst [vmem:[%s243 + $0x160] sm:$0xff] %v1023
        %1088 = vst [vmem:[%s243 + $0x168] sm:$0xff] %v1024
        %1089 = vst [vmem:[%s243 + $0x170] sm:$0xff] %v1025
        %1090 = vst [vmem:[%s243 + $0x178] sm:$0xff] %v1026
        %1091 = vst [vmem:[%s243 + $0x180] sm:$0xff] %v1027
        %1092 = vst [vmem:[%s243 + $0x188] sm:$0xff] %v1028
        %1093 = vst [vmem:[%s243 + $0x190] sm:$0xff] %v1029
        %1094 = vst [vmem:[%s243 + $0x198] sm:$0xff] %v1030
        %1095 = vst [vmem:[%s243 + $0x1a0] sm:$0xff] %v1031
        %1096 = vst [vmem:[%s243 + $0x1a8] sm:$0xff] %v1032
        %1097 = vst [vmem:[%s243 + $0x1b0] sm:$0xff] %v1033
        %1098 = vst [vmem:[%s243 + $0x1b8] sm:$0xff] %v1034
        %1099 = vst [vmem:[%s243 + $0x1c0] sm:$0xff] %v1035
        %1100 = vst [vmem:[%s243 + $0x1c8] sm:$0xff] %v1036
        %1101 = vst [vmem:[%s243 + $0x1d0] sm:$0xff] %v1037
        %1102 = vst [vmem:[%s243 + $0x1d8] sm:$0xff] %v1038
        %1103 = vst [vmem:[%s243 + $0x1e0] sm:$0xff] %v1039
        %1104 = vst [vmem:[%s243 + $0x1e8] sm:$0xff] %v1040
        %1105 = vst [vmem:[%s243 + $0x1f0] sm:$0xff] %v1041
        %1106 = vst [vmem:[%s243 + $0x1f8] sm:$0xff] %v1042
        %s1107 = sand.u32 %s140, 1
        %s1108 = scalar_lea.sflag [#allocation4], %s1107
        %s1109 = sand.u32 %s140, 1
        %s1110 = smul.addr %s1109, 512
        %s1111 = scalar_lea.vmem [#allocation5], %s1110
        // Predicated region
        $region45: #{tpu_custom_call.1} parent=39 // pred_check
          %p1112 = pneg %p150
        $region46: #{tpu_custom_call.1} parent=39 // pred_check_branch
          %1114 = sbr.rel (%p1112) target = $region48
        $region47: #{tpu_custom_call.1} parent=39 // pred_region
          %s1115 = smul.u32 2, %s22
          %s1117 = ssub.s32 8192, 8192
          %1118 = vsyncadd %s1108, %s1117
          %s1119 = smul.addr %s1115, 32
          %s1120 = smul.addr %s1119, 128
          %s1121 = scalar_lea.hbm %s5, %s1120
          %s1122 = sshll.u32 %s1111, 4
          %s1123 = int_to_ptr.vmem [resolvable:$true] %s1122
          %1128 = dma.vmem_to_hbm [thread:$0]  %s1123, 8192, %s1121, %s1108, 256, 256, 16
        $region48: #{tpu_custom_call.1} parent=39 // pred_fallthru
          _
      $region40: #{tpu_custom_call.1} parent=5 // pred_fallthru
        _
      %p1129 = scmp.le.s32.totalorder 2, %s17
      // Predicated region
      $region49: #{tpu_custom_call.1} parent=5 // pred_check
        %p1130 = pneg %p1129
      $region50: #{tpu_custom_call.1} parent=5 // pred_check_branch
        %1132 = sbr.rel (%p1130) target = $region52
      $region51: #{tpu_custom_call.1} parent=5 // pred_region
        %s1133 = ssub.s32 %s17, 2
        // Predicated region
        $region53: #{tpu_custom_call.1} parent=51 // pred_check
          %p1134 = pneg %p156
        $region54: #{tpu_custom_call.1} parent=51 // pred_check_branch
          %1136 = sbr.rel (%p1134) target = $region56
        $region55: #{tpu_custom_call.1} parent=51 // pred_region
          %s1137 = sand.u32 %s141, 1
          %s1138 = scalar_lea.sflag [#allocation4], %s1137
          %s1139 = sand.u32 %s141, 1
          %s1140 = smul.addr %s1139, 512
          %s1141 = scalar_lea.vmem [#allocation5], %s1140
          %1142 = dma.done %s1138, 8192
        $region56: #{tpu_custom_call.1} parent=51 // pred_fallthru
          _
      $region52: #{tpu_custom_call.1} parent=5 // pred_fallthru
        _
    $region6: #{tpu_custom_call.1} parent=1 // loop_footer
      %s21 = sadd.s32 1, %s17
    $region7: #{tpu_custom_call.1} parent=1 // loop_footer_branch
      %16 = sbr.rel target = $region3
    $region8: #{tpu_custom_call.1} parent=1 // loop_exit
      _
    %1143 = vsyncpa [#allocation3], 1
    %s1144 = scalar_lea.sflag [#allocation3], 1
    %1145 = vsyncpa %s1144, 1
    %1146 = vsyncpa [#allocation4], 1
    %s1147 = scalar_lea.sflag [#allocation4], 1
    %1148 = vsyncpa %s1147, 1

</llo_original>
